<compile_context>
chip_gen: v7x
topology: tpu7x:2x2x1
jax: 0.10.0
libtpu: 0.0.40
codegen_flags: <defaults>
</compile_context>

<pallas_src>
import jax
import jax.numpy as jnp
from jax.experimental import pallas as pl
from jax.experimental.pallas import tpu as pltpu

GRID_SIZE = 5
SPLINE_ORDER = 3
N_BASIS = GRID_SIZE + SPLINE_ORDER            # spline coeffs per input feature (= 8)
N_KNOTS = GRID_SIZE + 2 * SPLINE_ORDER + 1    # knots per input feature (= 12)
GRID_RANGE = (-1.0, 1.0)
COEF_ROWS = 2 + 4 * SPLINE_ORDER              # packed coefficient-table rows (= 14)


def _round_up(v, m):
    return ((v + m - 1) // m) * m


# ----------------------------------------------------------------------------
# In-kernel KANLinear layer (runs entirely on VMEM-resident data)
# ----------------------------------------------------------------------------
def _kan_layer(x, coef, bw_t, sw_flat):
    """One KANLinear forward.

    x:       (N, in)                        activations (f32)
    coef:    (COEF_ROWS, (N_KNOTS-1)*in)    packed knot / reciprocal table
    bw_t:    (in, out)                      base weight (transposed)
    sw_flat: (N_BASIS*in, out)              spline_weight*scaler, basis-major flat
    returns: (N, out) float32
    """
    n, in_f = x.shape
    l0 = N_KNOTS - 1                                   # 11 order-0 intervals

    # --- order-0 indicator bases, lane-flat layout: column = l*in + j --------
    x_rep = jnp.concatenate([x] * l0, axis=-1)         # (N, 11*in)
    t_lo = coef[0:1, :]                                # knot[l]
    t_hi = coef[1:2, :]                                # knot[l+1]
    b = ((x_rep >= t_lo) & (x_rep < t_hi)).astype(jnp.float32)

    # --- Cox-de Boor recursion, divide-free (affine coeffs precomputed) ------
    row = 2
    for k in range(1, SPLINE_ORDER + 1):               # static unroll (3)
        w = (N_KNOTS - 1 - k) * in_f
        xk = x_rep[:, :w]
        wl = coef[row + 0:row + 1, :w]                 # 1/(t[l+k]-t[l])
        bl = coef[row + 1:row + 2, :w]                 # -t[l]   * wl
        wr = coef[row + 2:row + 3, :w]                 # -1/(t[l+k+1]-t[l+1])
        br = coef[row + 3:row + 4, :w]                 # t[l+k+1]* (-wr)
        row += 4
        b = (xk * wl + bl) * b[:, :w] + (xk * wr + br) * b[:, in_f:in_f + w]
    # b: (N, N_BASIS*in) — already the flat operand for the fused spline matmul.

    # --- base branch (K=in) + single fused spline contraction (K=N_BASIS*in) -
    base_out = jnp.dot(x * jax.nn.sigmoid(x), bw_t,
                       preferred_element_type=jnp.float32)
    spline_out = jnp.dot(b, sw_flat, preferred_element_type=jnp.float32)
    return base_out + spline_out


def loralin_kan_kernel(x_ref, c1_ref, bw1_ref, sw1_ref,
                       c2_ref, bw2_ref, sw2_ref, o_ref):
    h = _kan_layer(x_ref[...], c1_ref[...], bw1_ref[...], sw1_ref[...])
    o_ref[...] = _kan_layer(h, c2_ref[...], bw2_ref[...], sw2_ref[...])


# ----------------------------------------------------------------------------
# Host-side parameter construction
# ----------------------------------------------------------------------------
def _make_coef(knots, in_f):
    """Packed (COEF_ROWS, 11*in_f) table: knots + affine recursion coeffs."""
    l0 = N_KNOTS - 1
    width = l0 * in_f

    def rep(vals):
        a = jnp.repeat(vals.astype(jnp.float32), in_f)      # column = l*in + j
        return jnp.pad(a, (0, width - a.shape[0]))

    rows = [rep(knots[:l0]), rep(knots[1:l0 + 1])]
    for k in range(1, SPLINE_ORDER + 1):
        lk = N_KNOTS - 1 - k
        t_l = knots[:lk]
        t_lk = knots[k:k + lk]
        t_l1 = knots[1:1 + lk]
        t_lk1 = knots[k + 1:k + 1 + lk]
        inv_dl = 1.0 / (t_lk - t_l)
        inv_dr = 1.0 / (t_lk1 - t_l1)
        rows += [rep(inv_dl), rep(-t_l * inv_dl),
                 rep(-inv_dr), rep(t_lk1 * inv_dr)]
    return jnp.stack(rows, axis=0)                           # (14, 11*in_f)


def make_kan_params(key, in_f, out_f):
    """Deterministic synthetic parameters for one KANLinear(in_f, out_f)."""
    k1, k2, k3 = jax.random.split(key, 3)
    h = (GRID_RANGE[1] - GRID_RANGE[0]) / GRID_SIZE
    knots = (jnp.arange(-SPLINE_ORDER, GRID_SIZE + SPLINE_ORDER + 1,
                        dtype=jnp.float32) * h + GRID_RANGE[0])       # (N_KNOTS,)

    base_w = jax.random.normal(k1, (out_f, in_f), jnp.float32) / jnp.sqrt(in_f)
    spline_w = 0.1 * jax.random.normal(k2, (out_f, in_f, N_BASIS), jnp.float32)
    spline_scaler = 1.0 + 0.1 * jax.random.normal(k3, (out_f, in_f), jnp.float32)
    scaled = spline_w * spline_scaler[:, :, None]                      # (out, in, S)

    # kernel-format params
    coef = _make_coef(knots, in_f)                                     # (14, 11*in)
    bw_t = base_w.T                                                    # (in, out)
    sw_flat = jnp.transpose(scaled, (2, 1, 0)).reshape(N_BASIS * in_f, out_f)

    # reference-format params
    grid = jnp.tile(knots[None, :], (in_f, 1))                         # (in, N_KNOTS)
    return dict(coef=coef, bw_t=bw_t, sw_flat=sw_flat,
                grid=grid, base_w=base_w, scaled=scaled)


# ----------------------------------------------------------------------------
# Wrapper: row-tiled grid, weights VMEM-resident, lane-dense padded output
# ----------------------------------------------------------------------------
def loralin_kan_forward(x, p1, p2, tile_n=1024):
    lead = x.shape[:-1]
    in_f = x.shape[-1]
    n = 1
    for d in lead:
        n *= d
    x2d = x.reshape(n, in_f).astype(jnp.float32)
    out_f = p2["bw_t"].shape[1]

    # Row tiling (sublane axis): pad rows to a tile multiple.
    tile = min(tile_n, _round_up(n, 8))
    n_pad = _round_up(n, tile)
    if n_pad != n:
        x2d = jnp.pad(x2d, ((0, n_pad - n), (0, 0)))

    # Lane-dense output: zero-pad layer-2 weight columns to a multiple of 128
    # so the output store is unmasked; extra columns are exactly zero and are
    # sliced off after the call.
    out_pad = _round_up(out_f, 128)
    bw2 = p2["bw_t"]
    sw2 = p2["sw_flat"]
    if out_pad != out_f:
        bw2 = jnp.pad(bw2, ((0, 0), (0, out_pad - out_f)))
        sw2 = jnp.pad(sw2, ((0, 0), (0, out_pad - out_f)))

    def full_spec(arr):                      # whole array, resident across grid
        return pl.BlockSpec(arr.shape, lambda i: (0, 0))

    out2d = pl.pallas_call(
        loralin_kan_kernel,
        out_shape=jax.ShapeDtypeStruct((n_pad, out_pad), jnp.float32),
        grid=(n_pad // tile,),
        in_specs=[
            pl.BlockSpec((tile, in_f), lambda i: (i, 0)),
            full_spec(p1["coef"]), full_spec(p1["bw_t"]), full_spec(p1["sw_flat"]),
            full_spec(p2["coef"]), full_spec(bw2), full_spec(sw2),
        ],
        out_specs=pl.BlockSpec((tile, out_pad), lambda i: (i, 0)),
        compiler_params=pltpu.CompilerParams(
            dimension_semantics=("parallel",)),
    )(x2d, p1["coef"], p1["bw_t"], p1["sw_flat"],
      p2["coef"], bw2, sw2)
    return out2d[:n, :out_f].reshape(*lead, out_f)


# ----------------------------------------------------------------------------
# Pure-JAX reference mirroring the PyTorch efficient-kan code path
# ----------------------------------------------------------------------------
def kan_layer_ref(x, grid, base_w, scaled):
    base_out = (x * jax.nn.sigmoid(x)) @ base_w.T
    xe = x[:, :, None]
    g = grid[None, :, :]
    bases = ((xe >= g[:, :, :-1]) & (xe < g[:, :, 1:])).astype(x.dtype)
    for k in range(1, SPLINE_ORDER + 1):
        bases = ((xe - g[:, :, :-(k + 1)])
                 / (g[:, :, k:-1] - g[:, :, :-(k + 1)]) * bases[:, :, :-1]
                 + (g[:, :, k + 1:] - xe)
                 / (g[:, :, k + 1:] - g[:, :, 1:-k]) * bases[:, :, 1:])
    spline_out = bases.reshape(x.shape[0], -1) @ scaled.reshape(scaled.shape[0], -1).T
    return base_out + spline_out


if __name__ == "__main__":
    in_features, out_features, rank_ratio = 32, 32, 0.5
    rank = max(2, int(min(in_features, out_features) * rank_ratio))   # 16

    key = jax.random.PRNGKey(0)
    kx, kl1, kl2 = jax.random.split(key, 3)
    x = jax.random.normal(kx, (2, 8, in_features), jnp.float32)

    p1 = make_kan_params(kl1, in_features, rank)
    p2 = make_kan_params(kl2, rank, out_features)

    out = loralin_kan_forward(x, p1, p2)
    jax.block_until_ready(out)

    x2d = x.reshape(-1, in_features)
    h_ref = kan_layer_ref(x2d, p1["grid"], p1["base_w"], p1["scaled"])
    ref = kan_layer_ref(h_ref, p2["grid"], p2["base_w"], p2["scaled"]
                        ).reshape(2, 8, out_features)
    assert out.shape == (2, 8, out_features)
    assert jnp.allclose(out, ref, atol=5e-4, rtol=5e-4), "mismatch vs reference"
    print("KERNEL_OK")
</pallas_src>

<mosaic_0001>
module attributes {stable_mosaic.version = 11 : i64} {
  func.func @loralin_kan_kernel(%arg0: i32, %arg1: memref<16x32xf32, #tpu.memory_space<vmem>>, %arg2: memref<14x352xf32, #tpu.memory_space<vmem>>, %arg3: memref<32x16xf32, #tpu.memory_space<vmem>>, %arg4: memref<256x16xf32, #tpu.memory_space<vmem>>, %arg5: memref<14x176xf32, #tpu.memory_space<vmem>>, %arg6: memref<16x128xf32, #tpu.memory_space<vmem>>, %arg7: memref<128x128xf32, #tpu.memory_space<vmem>>, %arg8: memref<16x128xf32, #tpu.memory_space<vmem>>) attributes {dimension_semantics = [#tpu.dimension_semantics<parallel>], iteration_bounds = array<i64: 1>, scalar_prefetch = 0 : i64, scratch_operands = 0 : i64, tpu.core_type = #tpu.core_type<tc>, window_params = [{transform_indices = @transform_0, window_bounds = array<i64: 16, 32>}, {pipeline_mode = #tpu.pipeline_mode<synchronous>, transform_indices = @transform_1, window_bounds = array<i64: 14, 352>}, {pipeline_mode = #tpu.pipeline_mode<synchronous>, transform_indices = @transform_2, window_bounds = array<i64: 32, 16>}, {pipeline_mode = #tpu.pipeline_mode<synchronous>, transform_indices = @transform_3, window_bounds = array<i64: 256, 16>}, {pipeline_mode = #tpu.pipeline_mode<synchronous>, transform_indices = @transform_4, window_bounds = array<i64: 14, 176>}, {pipeline_mode = #tpu.pipeline_mode<synchronous>, transform_indices = @transform_5, window_bounds = array<i64: 16, 128>}, {pipeline_mode = #tpu.pipeline_mode<synchronous>, transform_indices = @transform_6, window_bounds = array<i64: 128, 128>}, {transform_indices = @transform_7, window_bounds = array<i64: 16, 128>}]} {
    %c0 = arith.constant 0 : index
    %c0_0 = arith.constant 0 : index
    %0 = vector.load %arg1[%c0, %c0_0] : memref<16x32xf32, #tpu.memory_space<vmem>>, vector<16x32xf32>
    %c0_1 = arith.constant 0 : index
    %c0_2 = arith.constant 0 : index
    %1 = vector.load %arg2[%c0_1, %c0_2] : memref<14x352xf32, #tpu.memory_space<vmem>>, vector<14x352xf32>
    %c0_3 = arith.constant 0 : index
    %c0_4 = arith.constant 0 : index
    %2 = vector.load %arg3[%c0_3, %c0_4] : memref<32x16xf32, #tpu.memory_space<vmem>>, vector<32x16xf32>
    %c0_5 = arith.constant 0 : index
    %c0_6 = arith.constant 0 : index
    %3 = vector.load %arg4[%c0_5, %c0_6] : memref<256x16xf32, #tpu.memory_space<vmem>>, vector<256x16xf32>
    %4 = tpu.concatenate %0, %0, %0, %0, %0, %0, %0, %0, %0, %0, %0 in 1 : vector<16x32xf32>, vector<16x32xf32>, vector<16x32xf32>, vector<16x32xf32>, vector<16x32xf32>, vector<16x32xf32>, vector<16x32xf32>, vector<16x32xf32>, vector<16x32xf32>, vector<16x32xf32>, vector<16x32xf32> -> vector<16x352xf32>
    %5 = vector.extract_strided_slice %1 {offsets = [0, 0], sizes = [1, 352], strides = [1, 1]} : vector<14x352xf32> to vector<1x352xf32>
    %6 = vector.extract_strided_slice %1 {offsets = [1, 0], sizes = [1, 352], strides = [1, 1]} : vector<14x352xf32> to vector<1x352xf32>
    %7 = vector.broadcast %5 : vector<1x352xf32> to vector<16x352xf32>
    %8 = arith.cmpf oge, %4, %7 : vector<16x352xf32>
    %9 = vector.broadcast %6 : vector<1x352xf32> to vector<16x352xf32>
    %10 = arith.cmpf olt, %4, %9 : vector<16x352xf32>
    %11 = arith.andi %8, %10 : vector<16x352xi1>
    %12 = arith.extui %11 : vector<16x352xi1> to vector<16x352xi32>
    %13 = arith.sitofp %12 : vector<16x352xi32> to vector<16x352xf32>
    %14 = vector.extract_strided_slice %4 {offsets = [0, 0], sizes = [16, 320], strides = [1, 1]} : vector<16x352xf32> to vector<16x320xf32>
    %15 = vector.extract_strided_slice %1 {offsets = [2, 0], sizes = [1, 320], strides = [1, 1]} : vector<14x352xf32> to vector<1x320xf32>
    %16 = vector.extract_strided_slice %1 {offsets = [3, 0], sizes = [1, 320], strides = [1, 1]} : vector<14x352xf32> to vector<1x320xf32>
    %17 = vector.extract_strided_slice %1 {offsets = [4, 0], sizes = [1, 320], strides = [1, 1]} : vector<14x352xf32> to vector<1x320xf32>
    %18 = vector.extract_strided_slice %1 {offsets = [5, 0], sizes = [1, 320], strides = [1, 1]} : vector<14x352xf32> to vector<1x320xf32>
    %19 = vector.broadcast %15 : vector<1x320xf32> to vector<16x320xf32>
    %20 = arith.mulf %14, %19 : vector<16x320xf32>
    %21 = vector.broadcast %16 : vector<1x320xf32> to vector<16x320xf32>
    %22 = arith.addf %20, %21 : vector<16x320xf32>
    %23 = vector.extract_strided_slice %13 {offsets = [0, 0], sizes = [16, 320], strides = [1, 1]} : vector<16x352xf32> to vector<16x320xf32>
    %24 = arith.mulf %22, %23 : vector<16x320xf32>
    %25 = vector.broadcast %17 : vector<1x320xf32> to vector<16x320xf32>
    %26 = arith.mulf %14, %25 : vector<16x320xf32>
    %27 = vector.broadcast %18 : vector<1x320xf32> to vector<16x320xf32>
    %28 = arith.addf %26, %27 : vector<16x320xf32>
    %29 = vector.extract_strided_slice %13 {offsets = [0, 32], sizes = [16, 320], strides = [1, 1]} : vector<16x352xf32> to vector<16x320xf32>
    %30 = arith.mulf %28, %29 : vector<16x320xf32>
    %31 = arith.addf %24, %30 : vector<16x320xf32>
    %32 = vector.extract_strided_slice %4 {offsets = [0, 0], sizes = [16, 288], strides = [1, 1]} : vector<16x352xf32> to vector<16x288xf32>
    %33 = vector.extract_strided_slice %1 {offsets = [6, 0], sizes = [1, 288], strides = [1, 1]} : vector<14x352xf32> to vector<1x288xf32>
    %34 = vector.extract_strided_slice %1 {offsets = [7, 0], sizes = [1, 288], strides = [1, 1]} : vector<14x352xf32> to vector<1x288xf32>
    %35 = vector.extract_strided_slice %1 {offsets = [8, 0], sizes = [1, 288], strides = [1, 1]} : vector<14x352xf32> to vector<1x288xf32>
    %36 = vector.extract_strided_slice %1 {offsets = [9, 0], sizes = [1, 288], strides = [1, 1]} : vector<14x352xf32> to vector<1x288xf32>
    %37 = vector.broadcast %33 : vector<1x288xf32> to vector<16x288xf32>
    %38 = arith.mulf %32, %37 : vector<16x288xf32>
    %39 = vector.broadcast %34 : vector<1x288xf32> to vector<16x288xf32>
    %40 = arith.addf %38, %39 : vector<16x288xf32>
    %41 = vector.extract_strided_slice %31 {offsets = [0, 0], sizes = [16, 288], strides = [1, 1]} : vector<16x320xf32> to vector<16x288xf32>
    %42 = arith.mulf %40, %41 : vector<16x288xf32>
    %43 = vector.broadcast %35 : vector<1x288xf32> to vector<16x288xf32>
    %44 = arith.mulf %32, %43 : vector<16x288xf32>
    %45 = vector.broadcast %36 : vector<1x288xf32> to vector<16x288xf32>
    %46 = arith.addf %44, %45 : vector<16x288xf32>
    %47 = vector.extract_strided_slice %31 {offsets = [0, 32], sizes = [16, 288], strides = [1, 1]} : vector<16x320xf32> to vector<16x288xf32>
    %48 = arith.mulf %46, %47 : vector<16x288xf32>
    %49 = arith.addf %42, %48 : vector<16x288xf32>
    %50 = vector.extract_strided_slice %4 {offsets = [0, 0], sizes = [16, 256], strides = [1, 1]} : vector<16x352xf32> to vector<16x256xf32>
    %51 = vector.extract_strided_slice %1 {offsets = [10, 0], sizes = [1, 256], strides = [1, 1]} : vector<14x352xf32> to vector<1x256xf32>
    %52 = vector.extract_strided_slice %1 {offsets = [11, 0], sizes = [1, 256], strides = [1, 1]} : vector<14x352xf32> to vector<1x256xf32>
    %53 = vector.extract_strided_slice %1 {offsets = [12, 0], sizes = [1, 256], strides = [1, 1]} : vector<14x352xf32> to vector<1x256xf32>
    %54 = vector.extract_strided_slice %1 {offsets = [13, 0], sizes = [1, 256], strides = [1, 1]} : vector<14x352xf32> to vector<1x256xf32>
    %55 = vector.broadcast %51 : vector<1x256xf32> to vector<16x256xf32>
    %56 = arith.mulf %50, %55 : vector<16x256xf32>
    %57 = vector.broadcast %52 : vector<1x256xf32> to vector<16x256xf32>
    %58 = arith.addf %56, %57 : vector<16x256xf32>
    %59 = vector.extract_strided_slice %49 {offsets = [0, 0], sizes = [16, 256], strides = [1, 1]} : vector<16x288xf32> to vector<16x256xf32>
    %60 = arith.mulf %58, %59 : vector<16x256xf32>
    %61 = vector.broadcast %53 : vector<1x256xf32> to vector<16x256xf32>
    %62 = arith.mulf %50, %61 : vector<16x256xf32>
    %63 = vector.broadcast %54 : vector<1x256xf32> to vector<16x256xf32>
    %64 = arith.addf %62, %63 : vector<16x256xf32>
    %65 = vector.extract_strided_slice %49 {offsets = [0, 32], sizes = [16, 256], strides = [1, 1]} : vector<16x288xf32> to vector<16x256xf32>
    %66 = arith.mulf %64, %65 : vector<16x256xf32>
    %67 = arith.addf %60, %66 : vector<16x256xf32>
    %68 = arith.negf %0 : vector<16x32xf32>
    %69 = math.exp %68 : vector<16x32xf32>
    %cst = arith.constant 1.000000e+00 : f32
    %70 = vector.broadcast %cst : f32 to vector<16x32xf32>
    %71 = arith.addf %70, %69 : vector<16x32xf32>
    %72 = arith.divf %70, %71 : vector<16x32xf32>
    %73 = arith.mulf %0, %72 : vector<16x32xf32>
    %cst_7 = arith.constant dense<0.000000e+00> : vector<16x16xf32>
    %74 = tpu.matmul %73, %2, %cst_7 {dimension_numbers = #tpu.dot_dimension_numbers<[1], [0], [0], [1], [0, 0, 1, 1], [], []>} : vector<16x32xf32>, vector<32x16xf32>, vector<16x16xf32> -> vector<16x16xf32>
    %cst_8 = arith.constant dense<0.000000e+00> : vector<16x16xf32>
    %75 = tpu.matmul %67, %3, %cst_8 {dimension_numbers = #tpu.dot_dimension_numbers<[1], [0], [0], [1], [0, 0, 1, 1], [], []>} : vector<16x256xf32>, vector<256x16xf32>, vector<16x16xf32> -> vector<16x16xf32>
    %76 = arith.addf %74, %75 : vector<16x16xf32>
    %c0_9 = arith.constant 0 : index
    %c0_10 = arith.constant 0 : index
    %77 = vector.load %arg5[%c0_9, %c0_10] : memref<14x176xf32, #tpu.memory_space<vmem>>, vector<14x176xf32>
    %c0_11 = arith.constant 0 : index
    %c0_12 = arith.constant 0 : index
    %78 = vector.load %arg6[%c0_11, %c0_12] : memref<16x128xf32, #tpu.memory_space<vmem>>, vector<16x128xf32>
    %c0_13 = arith.constant 0 : index
    %c0_14 = arith.constant 0 : index
    %79 = vector.load %arg7[%c0_13, %c0_14] : memref<128x128xf32, #tpu.memory_space<vmem>>, vector<128x128xf32>
    %80 = tpu.concatenate %76, %76, %76, %76, %76, %76, %76, %76, %76, %76, %76 in 1 : vector<16x16xf32>, vector<16x16xf32>, vector<16x16xf32>, vector<16x16xf32>, vector<16x16xf32>, vector<16x16xf32>, vector<16x16xf32>, vector<16x16xf32>, vector<16x16xf32>, vector<16x16xf32>, vector<16x16xf32> -> vector<16x176xf32>
    %81 = vector.extract_strided_slice %77 {offsets = [0, 0], sizes = [1, 176], strides = [1, 1]} : vector<14x176xf32> to vector<1x176xf32>
    %82 = vector.extract_strided_slice %77 {offsets = [1, 0], sizes = [1, 176], strides = [1, 1]} : vector<14x176xf32> to vector<1x176xf32>
    %83 = vector.broadcast %81 : vector<1x176xf32> to vector<16x176xf32>
    %84 = arith.cmpf oge, %80, %83 : vector<16x176xf32>
    %85 = vector.broadcast %82 : vector<1x176xf32> to vector<16x176xf32>
    %86 = arith.cmpf olt, %80, %85 : vector<16x176xf32>
    %87 = arith.andi %84, %86 : vector<16x176xi1>
    %88 = arith.extui %87 : vector<16x176xi1> to vector<16x176xi32>
    %89 = arith.sitofp %88 : vector<16x176xi32> to vector<16x176xf32>
    %90 = vector.extract_strided_slice %80 {offsets = [0, 0], sizes = [16, 160], strides = [1, 1]} : vector<16x176xf32> to vector<16x160xf32>
    %91 = vector.extract_strided_slice %77 {offsets = [2, 0], sizes = [1, 160], strides = [1, 1]} : vector<14x176xf32> to vector<1x160xf32>
    %92 = vector.extract_strided_slice %77 {offsets = [3, 0], sizes = [1, 160], strides = [1, 1]} : vector<14x176xf32> to vector<1x160xf32>
    %93 = vector.extract_strided_slice %77 {offsets = [4, 0], sizes = [1, 160], strides = [1, 1]} : vector<14x176xf32> to vector<1x160xf32>
    %94 = vector.extract_strided_slice %77 {offsets = [5, 0], sizes = [1, 160], strides = [1, 1]} : vector<14x176xf32> to vector<1x160xf32>
    %95 = vector.broadcast %91 : vector<1x160xf32> to vector<16x160xf32>
    %96 = arith.mulf %90, %95 : vector<16x160xf32>
    %97 = vector.broadcast %92 : vector<1x160xf32> to vector<16x160xf32>
    %98 = arith.addf %96, %97 : vector<16x160xf32>
    %99 = vector.extract_strided_slice %89 {offsets = [0, 0], sizes = [16, 160], strides = [1, 1]} : vector<16x176xf32> to vector<16x160xf32>
    %100 = arith.mulf %98, %99 : vector<16x160xf32>
    %101 = vector.broadcast %93 : vector<1x160xf32> to vector<16x160xf32>
    %102 = arith.mulf %90, %101 : vector<16x160xf32>
    %103 = vector.broadcast %94 : vector<1x160xf32> to vector<16x160xf32>
    %104 = arith.addf %102, %103 : vector<16x160xf32>
    %105 = vector.extract_strided_slice %89 {offsets = [0, 16], sizes = [16, 160], strides = [1, 1]} : vector<16x176xf32> to vector<16x160xf32>
    %106 = arith.mulf %104, %105 : vector<16x160xf32>
    %107 = arith.addf %100, %106 : vector<16x160xf32>
    %108 = vector.extract_strided_slice %80 {offsets = [0, 0], sizes = [16, 144], strides = [1, 1]} : vector<16x176xf32> to vector<16x144xf32>
    %109 = vector.extract_strided_slice %77 {offsets = [6, 0], sizes = [1, 144], strides = [1, 1]} : vector<14x176xf32> to vector<1x144xf32>
    %110 = vector.extract_strided_slice %77 {offsets = [7, 0], sizes = [1, 144], strides = [1, 1]} : vector<14x176xf32> to vector<1x144xf32>
    %111 = vector.extract_strided_slice %77 {offsets = [8, 0], sizes = [1, 144], strides = [1, 1]} : vector<14x176xf32> to vector<1x144xf32>
    %112 = vector.extract_strided_slice %77 {offsets = [9, 0], sizes = [1, 144], strides = [1, 1]} : vector<14x176xf32> to vector<1x144xf32>
    %113 = vector.broadcast %109 : vector<1x144xf32> to vector<16x144xf32>
    %114 = arith.mulf %108, %113 : vector<16x144xf32>
    %115 = vector.broadcast %110 : vector<1x144xf32> to vector<16x144xf32>
    %116 = arith.addf %114, %115 : vector<16x144xf32>
    %117 = vector.extract_strided_slice %107 {offsets = [0, 0], sizes = [16, 144], strides = [1, 1]} : vector<16x160xf32> to vector<16x144xf32>
    %118 = arith.mulf %116, %117 : vector<16x144xf32>
    %119 = vector.broadcast %111 : vector<1x144xf32> to vector<16x144xf32>
    %120 = arith.mulf %108, %119 : vector<16x144xf32>
    %121 = vector.broadcast %112 : vector<1x144xf32> to vector<16x144xf32>
    %122 = arith.addf %120, %121 : vector<16x144xf32>
    %123 = vector.extract_strided_slice %107 {offsets = [0, 16], sizes = [16, 144], strides = [1, 1]} : vector<16x160xf32> to vector<16x144xf32>
    %124 = arith.mulf %122, %123 : vector<16x144xf32>
    %125 = arith.addf %118, %124 : vector<16x144xf32>
    %126 = vector.extract_strided_slice %80 {offsets = [0, 0], sizes = [16, 128], strides = [1, 1]} : vector<16x176xf32> to vector<16x128xf32>
    %127 = vector.extract_strided_slice %77 {offsets = [10, 0], sizes = [1, 128], strides = [1, 1]} : vector<14x176xf32> to vector<1x128xf32>
    %128 = vector.extract_strided_slice %77 {offsets = [11, 0], sizes = [1, 128], strides = [1, 1]} : vector<14x176xf32> to vector<1x128xf32>
    %129 = vector.extract_strided_slice %77 {offsets = [12, 0], sizes = [1, 128], strides = [1, 1]} : vector<14x176xf32> to vector<1x128xf32>
    %130 = vector.extract_strided_slice %77 {offsets = [13, 0], sizes = [1, 128], strides = [1, 1]} : vector<14x176xf32> to vector<1x128xf32>
    %131 = vector.broadcast %127 : vector<1x128xf32> to vector<16x128xf32>
    %132 = arith.mulf %126, %131 : vector<16x128xf32>
    %133 = vector.broadcast %128 : vector<1x128xf32> to vector<16x128xf32>
    %134 = arith.addf %132, %133 : vector<16x128xf32>
    %135 = vector.extract_strided_slice %125 {offsets = [0, 0], sizes = [16, 128], strides = [1, 1]} : vector<16x144xf32> to vector<16x128xf32>
    %136 = arith.mulf %134, %135 : vector<16x128xf32>
    %137 = vector.broadcast %129 : vector<1x128xf32> to vector<16x128xf32>
    %138 = arith.mulf %126, %137 : vector<16x128xf32>
    %139 = vector.broadcast %130 : vector<1x128xf32> to vector<16x128xf32>
    %140 = arith.addf %138, %139 : vector<16x128xf32>
    %141 = vector.extract_strided_slice %125 {offsets = [0, 16], sizes = [16, 128], strides = [1, 1]} : vector<16x144xf32> to vector<16x128xf32>
    %142 = arith.mulf %140, %141 : vector<16x128xf32>
    %143 = arith.addf %136, %142 : vector<16x128xf32>
    %144 = arith.negf %76 : vector<16x16xf32>
    %145 = math.exp %144 : vector<16x16xf32>
    %cst_15 = arith.constant 1.000000e+00 : f32
    %146 = vector.broadcast %cst_15 : f32 to vector<16x16xf32>
    %147 = arith.addf %146, %145 : vector<16x16xf32>
    %148 = arith.divf %146, %147 : vector<16x16xf32>
    %149 = arith.mulf %76, %148 : vector<16x16xf32>
    %cst_16 = arith.constant dense<0.000000e+00> : vector<16x128xf32>
    %150 = tpu.matmul %149, %78, %cst_16 {dimension_numbers = #tpu.dot_dimension_numbers<[1], [0], [0], [1], [0, 0, 1, 1], [], []>} : vector<16x16xf32>, vector<16x128xf32>, vector<16x128xf32> -> vector<16x128xf32>
    %cst_17 = arith.constant dense<0.000000e+00> : vector<16x128xf32>
    %151 = tpu.matmul %143, %79, %cst_17 {dimension_numbers = #tpu.dot_dimension_numbers<[1], [0], [0], [1], [0, 0, 1, 1], [], []>} : vector<16x128xf32>, vector<128x128xf32>, vector<16x128xf32> -> vector<16x128xf32>
    %152 = arith.addf %150, %151 : vector<16x128xf32>
    %c0_18 = arith.constant 0 : index
    %c0_19 = arith.constant 0 : index
    %153 = vector.load %arg8[%c0_18, %c0_19] : memref<16x128xf32, #tpu.memory_space<vmem>>, vector<16x128xf32>
    tpu.vector_store %arg8[%c0_18, %c0_19], %152 {strides = array<i32>} : memref<16x128xf32, #tpu.memory_space<vmem>>, vector<16x128xf32>,
    return
  }
  func.func @transform_0(%arg0: i32) -> (i32, i32) {
    %c0_i32 = arith.constant 0 : i32
    %c0_i32_0 = arith.constant 0 : i32
    return %arg0, %c0_i32 : i32, i32
  }
  func.func @transform_1(%arg0: i32) -> (i32, i32) {
    %c0_i32 = arith.constant 0 : i32
    %c0_i32_0 = arith.constant 0 : i32
    %c0_i32_1 = arith.constant 0 : i32
    return %c0_i32, %c0_i32_0 : i32, i32
  }
  func.func @transform_2(%arg0: i32) -> (i32, i32) {
    %c0_i32 = arith.constant 0 : i32
    %c0_i32_0 = arith.constant 0 : i32
    %c0_i32_1 = arith.constant 0 : i32
    return %c0_i32, %c0_i32_0 : i32, i32
  }
  func.func @transform_3(%arg0: i32) -> (i32, i32) {
    %c0_i32 = arith.constant 0 : i32
    %c0_i32_0 = arith.constant 0 : i32
    %c0_i32_1 = arith.constant 0 : i32
    return %c0_i32, %c0_i32_0 : i32, i32
  }
  func.func @transform_4(%arg0: i32) -> (i32, i32) {
    %c0_i32 = arith.constant 0 : i32
    %c0_i32_0 = arith.constant 0 : i32
    %c0_i32_1 = arith.constant 0 : i32
    return %c0_i32, %c0_i32_0 : i32, i32
  }
  func.func @transform_5(%arg0: i32) -> (i32, i32) {
    %c0_i32 = arith.constant 0 : i32
    %c0_i32_0 = arith.constant 0 : i32
    %c0_i32_1 = arith.constant 0 : i32
    return %c0_i32, %c0_i32_0 : i32, i32
  }
  func.func @transform_6(%arg0: i32) -> (i32, i32) {
    %c0_i32 = arith.constant 0 : i32
    %c0_i32_0 = arith.constant 0 : i32
    %c0_i32_1 = arith.constant 0 : i32
    return %c0_i32, %c0_i32_0 : i32, i32
  }
  func.func @transform_7(%arg0: i32) -> (i32, i32) {
    %c0_i32 = arith.constant 0 : i32
    %c0_i32_0 = arith.constant 0 : i32
    return %arg0, %c0_i32 : i32, i32
  }
}

</mosaic_0001>

<llo_original>
// kernel: tpu_custom_call.1
$region0: #{tpu_custom_call.1}
  #allocation0 [shape = 'u32[]', space=smem, size = 0x4, offset = 0x4, fixed_abs, tag = 'smem constant byte address 0x4 - core index']
  #allocation1 [shape = 'u32[144,128]{1,0:T(1,128)}', space=vmem, size = 0x12000, scoped, tag = 'internal scratch']
  %s0 = inlined_call_operand.vmem [shape: f32[16,32], index: 0, kind: input, shape index: {}]
  %s1 = inlined_call_operand.vmem [shape: f32[14,352], index: 1, kind: input, shape index: {}]
  %s2 = inlined_call_operand.vmem [shape: f32[32,16], index: 2, kind: input, shape index: {}]
  %s3 = inlined_call_operand.vmem [shape: f32[256,16], index: 3, kind: input, shape index: {}]
  %s4 = inlined_call_operand.vmem [shape: f32[14,176], index: 4, kind: input, shape index: {}]
  %s5 = inlined_call_operand.vmem [shape: f32[16,128], index: 5, kind: input, shape index: {}]
  %s6 = inlined_call_operand.vmem [shape: f32[128,128], index: 6, kind: input, shape index: {}]
  %s7 = inlined_call_operand.hbm [shape: f32[16,128], index: 7, kind: output, shape index: {}]
  %s8 = sld [smem:[#allocation0]]
  $region38: #{tpu_custom_call.1} parent=0
    _
  %s10 = ssub.s32 1, %s8
  %s11 = scalar_select 0, %s10, %s8
  $region1: #{tpu_custom_call.1} parent=0
    #allocation2 [shape = 'u8[8192]{0}', space=vmem, size = 0x2000, scoped, tag = 'output window, operand 0, single buffered']
    #allocation3 [shape = 's32[1]{0}', space=sflag, size = 0x4, scoped, tag = 'scoped memory for tpu_custom_call.1']
    %12 = vsyncpa [#allocation3], 0
    // Predicated region
    $region2: #{tpu_custom_call.1} parent=1 // pred_check
      _
    $region3: #{tpu_custom_call.1} parent=1 // pred_check_branch
      %14 = sbr.rel (0) target = $region5
    $region4: #{tpu_custom_call.1} parent=1 // pred_region
      _
    $region5: #{tpu_custom_call.1} parent=1 // pred_fallthru
      _
    // Predicated region
    $region6: #{tpu_custom_call.1} parent=1 // pred_check
      _
    $region7: #{tpu_custom_call.1} parent=1 // pred_check_branch
      %16 = sbr.rel (0) target = $region9
    $region8: #{tpu_custom_call.1} parent=1 // pred_region
      _
    $region9: #{tpu_custom_call.1} parent=1 // pred_fallthru
      _
    // Predicated region
    $region10: #{tpu_custom_call.1} parent=1 // pred_check
      _
    $region11: #{tpu_custom_call.1} parent=1 // pred_check_branch
      %18 = sbr.rel (0) target = $region13
    $region12: #{tpu_custom_call.1} parent=1 // pred_region
      _
    $region13: #{tpu_custom_call.1} parent=1 // pred_fallthru
      _
    // Predicated region
    $region14: #{tpu_custom_call.1} parent=1 // pred_check
      _
    $region15: #{tpu_custom_call.1} parent=1 // pred_check_branch
      %20 = sbr.rel (0) target = $region17
    $region16: #{tpu_custom_call.1} parent=1 // pred_region
      _
    $region17: #{tpu_custom_call.1} parent=1 // pred_fallthru
      _
    // Predicated region
    $region18: #{tpu_custom_call.1} parent=1 // pred_check
      _
    $region19: #{tpu_custom_call.1} parent=1 // pred_check_branch
      %22 = sbr.rel (0) target = $region21
    $region20: #{tpu_custom_call.1} parent=1 // pred_region
      _
    $region21: #{tpu_custom_call.1} parent=1 // pred_fallthru
      _
    // Predicated region
    $region22: #{tpu_custom_call.1} parent=1 // pred_check
      _
    $region23: #{tpu_custom_call.1} parent=1 // pred_check_branch
      %24 = sbr.rel (0) target = $region25
    $region24: #{tpu_custom_call.1} parent=1 // pred_region
      _
    $region25: #{tpu_custom_call.1} parent=1 // pred_fallthru
      _
    // Predicated region
    $region26: #{tpu_custom_call.1} parent=1 // pred_check
      _
    $region27: #{tpu_custom_call.1} parent=1 // pred_check_branch
      %26 = sbr.rel (0) target = $region29
    $region28: #{tpu_custom_call.1} parent=1 // pred_region
      _
    $region29: #{tpu_custom_call.1} parent=1 // pred_fallthru
      _
    %v27 = vld [vmem:[%s0] sm:$0xff]
    %v28 = vld [vmem:[%s0 + $0x8] sm:$0xff]
    %v29 = vld [vmem:[%s1] sm:$0xff]
    %v30 = vld [vmem:[%s1 + $0x8] sm:$0xff]
    %v31 = vld [vmem:[%s1 + $0x10] sm:$0xff]
    %v32 = vld [vmem:[%s1 + $0x18] sm:$0x3f]
    %v33 = vld [vmem:[%s1 + $0x20] sm:$0x3f]
    %v34 = vld [vmem:[%s1 + $0x28] sm:$0x3f]
    %v35 = vld [vmem:[%s2] sm:$0xff]
    %v36 = vld [vmem:[%s2 + $0x8] sm:$0xff]
    %v37 = vld [vmem:[%s2 + $0x10] sm:$0xff]
    %v38 = vld [vmem:[%s2 + $0x18] sm:$0xff]
    %v39 = vld [vmem:[%s3] sm:$0xff]
    %v40 = vld [vmem:[%s3 + $0x8] sm:$0xff]
    %v41 = vld [vmem:[%s3 + $0x10] sm:$0xff]
    %v42 = vld [vmem:[%s3 + $0x18] sm:$0xff]
    %v43 = vld [vmem:[%s3 + $0x20] sm:$0xff]
    %v44 = vld [vmem:[%s3 + $0x28] sm:$0xff]
    %v45 = vld [vmem:[%s3 + $0x30] sm:$0xff]
    %v46 = vld [vmem:[%s3 + $0x38] sm:$0xff]
    %v47 = vld [vmem:[%s3 + $0x40] sm:$0xff]
    %v48 = vld [vmem:[%s3 + $0x48] sm:$0xff]
    %v49 = vld [vmem:[%s3 + $0x50] sm:$0xff]
    %v50 = vld [vmem:[%s3 + $0x58] sm:$0xff]
    %v51 = vld [vmem:[%s3 + $0x60] sm:$0xff]
    %v52 = vld [vmem:[%s3 + $0x68] sm:$0xff]
    %v53 = vld [vmem:[%s3 + $0x70] sm:$0xff]
    %v54 = vld [vmem:[%s3 + $0x78] sm:$0xff]
    %v55 = vld [vmem:[%s3 + $0x80] sm:$0xff]
    %v56 = vld [vmem:[%s3 + $0x88] sm:$0xff]
    %v57 = vld [vmem:[%s3 + $0x90] sm:$0xff]
    %v58 = vld [vmem:[%s3 + $0x98] sm:$0xff]
    %v59 = vld [vmem:[%s3 + $0xa0] sm:$0xff]
    %v60 = vld [vmem:[%s3 + $0xa8] sm:$0xff]
    %v61 = vld [vmem:[%s3 + $0xb0] sm:$0xff]
    %v62 = vld [vmem:[%s3 + $0xb8] sm:$0xff]
    %v63 = vld [vmem:[%s3 + $0xc0] sm:$0xff]
    %v64 = vld [vmem:[%s3 + $0xc8] sm:$0xff]
    %v65 = vld [vmem:[%s3 + $0xd0] sm:$0xff]
    %v66 = vld [vmem:[%s3 + $0xd8] sm:$0xff]
    %v67 = vld [vmem:[%s3 + $0xe0] sm:$0xff]
    %v68 = vld [vmem:[%s3 + $0xe8] sm:$0xff]
    %v69 = vld [vmem:[%s3 + $0xf0] sm:$0xff]
    %v70 = vld [vmem:[%s3 + $0xf8] sm:$0xff]
    %73 = vrot.lane.b32.xlu0 %v27, 32
    %v74 = vpop.permute.xlu0 %73
    %75 = vrot.lane.b32.xlu0 %v28, 32
    %v76 = vpop.permute.xlu0 %75
    %79 = vrot.lane.b32.xlu0 %v27, 64
    %v80 = vpop.permute.xlu0 %79
    %81 = vrot.lane.b32.xlu0 %v28, 64
    %v82 = vpop.permute.xlu0 %81
    %85 = vrot.lane.b32.xlu0 %v27, 96
    %v86 = vpop.permute.xlu0 %85
    %87 = vrot.lane.b32.xlu0 %v28, 96
    %v88 = vpop.permute.xlu0 %87
    %vm91 = vcmask 261120
    %v92 = vsel %vm91, %v27, %v74
    %v93 = vsel %vm91, %v28, %v76
    %vm94 = vcmask 523264
    %v95 = vsel %vm94, %v92, %v80
    %v96 = vsel %vm94, %v93, %v82
    %vm97 = vcmask 785408
    %v98 = vsel %vm97, %v95, %v86
    %v99 = vsel %vm97, %v96, %v88
    %v100 = vlaneseq
    %v101 = vshrl.u32 %v100, 7
    %v102 = vsub.s32 0, %v101
    %v103 = vrot.slane %v29, %v102
    %v104 = vlaneseq
    %v105 = vshrl.u32 %v104, 7
    %v106 = vsub.s32 0, %v105
    %v107 = vrot.slane %v30, %v106
    %v108 = vlaneseq
    %v109 = vshrl.u32 %v108, 7
    %v110 = vsub.s32 0, %v109
    %v111 = vrot.slane %v31, %v110
    %vm112 = vcmp.ge.f32.partialorder %v98, %v103
    %vm113 = vcmp.ge.f32.partialorder %v98, %v107
    %vm114 = vcmp.ge.f32.partialorder %v95, %v111
    %vm115 = vcmp.ge.f32.partialorder %v99, %v103
    %vm116 = vcmp.ge.f32.partialorder %v99, %v107
    %vm117 = vcmp.ge.f32.partialorder %v96, %v111
    %v118 = vlaneseq
    %v119 = vshrl.u32 %v118, 7
    %v120 = vsub.s32 1, %v119
    %v121 = vrot.slane %v29, %v120
    %v122 = vlaneseq
    %v123 = vshrl.u32 %v122, 7
    %v124 = vsub.s32 1, %v123
    %v125 = vrot.slane %v30, %v124
    %v126 = vlaneseq
    %v127 = vshrl.u32 %v126, 7
    %v128 = vsub.s32 1, %v127
    %v129 = vrot.slane %v31, %v128
    %vm130 = vcmp.lt.f32.partialorder %v98, %v121
    %vm131 = vcmp.lt.f32.partialorder %v98, %v125
    %vm132 = vcmp.lt.f32.partialorder %v95, %v129
    %vm133 = vcmp.lt.f32.partialorder %v99, %v121
    %vm134 = vcmp.lt.f32.partialorder %v99, %v125
    %vm135 = vcmp.lt.f32.partialorder %v96, %v129
    %vm136 = vmand %vm112, %vm130
    %vm137 = vmand %vm113, %vm131
    %vm138 = vmand %vm114, %vm132
    %vm139 = vmand %vm115, %vm133
    %vm140 = vmand %vm116, %vm134
    %vm141 = vmand %vm117, %vm135
    %v142 = vsel %vm136, 1, 0
    %v143 = vsel %vm137, 1, 0
    %v144 = vsel %vm138, 1, 0
    %v145 = vsel %vm139, 1, 0
    %v146 = vsel %vm140, 1, 0
    %v147 = vsel %vm141, 1, 0
    %v148 = vcvt.s32.f32 %v142
    %v149 = vcvt.s32.f32 %v143
    %v150 = vcvt.s32.f32 %v144
    %v151 = vcvt.s32.f32 %v145
    %v152 = vcvt.s32.f32 %v146
    %v153 = vcvt.s32.f32 %v147
    %v154 = vlaneseq
    %v155 = vshrl.u32 %v154, 7
    %v156 = vsub.s32 2, %v155
    %v157 = vrot.slane %v29, %v156
    %v158 = vlaneseq
    %v159 = vshrl.u32 %v158, 7
    %v160 = vsub.s32 2, %v159
    %v161 = vrot.slane %v30, %v160
    %v162 = vlaneseq
    %v163 = vshrl.u32 %v162, 7
    %v164 = vsub.s32 2, %v163
    %v165 = vrot.slane %v31, %v164
    %v166 = vmul.f32 %v98, %v157
    %v167 = vmul.f32 %v98, %v161
    %v168 = vmul.f32 %v95, %v165
    %v169 = vmul.f32 %v99, %v157
    %v170 = vmul.f32 %v99, %v161
    %v171 = vmul.f32 %v96, %v165
    %v172 = vlaneseq
    %v173 = vshrl.u32 %v172, 7
    %v174 = vsub.s32 3, %v173
    %v175 = vrot.slane %v29, %v174
    %v176 = vlaneseq
    %v177 = vshrl.u32 %v176, 7
    %v178 = vsub.s32 3, %v177
    %v179 = vrot.slane %v30, %v178
    %v180 = vlaneseq
    %v181 = vshrl.u32 %v180, 7
    %v182 = vsub.s32 3, %v181
    %v183 = vrot.slane %v31, %v182
    %v184 = vadd.f32 %v166, %v175
    %v185 = vadd.f32 %v167, %v179
    %v186 = vadd.f32 %v168, %v183
    %v187 = vadd.f32 %v169, %v175
    %v188 = vadd.f32 %v170, %v179
    %v189 = vadd.f32 %v171, %v183
    %v190 = vmul.f32 %v184, %v148
    %v191 = vmul.f32 %v185, %v149
    %v192 = vmul.f32 %v186, %v150
    %v193 = vmul.f32 %v187, %v151
    %v194 = vmul.f32 %v188, %v152
    %v195 = vmul.f32 %v189, %v153
    %v196 = vlaneseq
    %v197 = vshrl.u32 %v196, 7
    %v198 = vsub.s32 4, %v197
    %v199 = vrot.slane %v29, %v198
    %v200 = vlaneseq
    %v201 = vshrl.u32 %v200, 7
    %v202 = vsub.s32 4, %v201
    %v203 = vrot.slane %v30, %v202
    %v204 = vlaneseq
    %v205 = vshrl.u32 %v204, 7
    %v206 = vsub.s32 4, %v205
    %v207 = vrot.slane %v31, %v206
    %v208 = vmul.f32 %v98, %v199
    %v209 = vmul.f32 %v98, %v203
    %v210 = vmul.f32 %v95, %v207
    %v211 = vmul.f32 %v99, %v199
    %v212 = vmul.f32 %v99, %v203
    %v213 = vmul.f32 %v96, %v207
    %v214 = vlaneseq
    %v215 = vshrl.u32 %v214, 7
    %v216 = vsub.s32 5, %v215
    %v217 = vrot.slane %v29, %v216
    %v218 = vlaneseq
    %v219 = vshrl.u32 %v218, 7
    %v220 = vsub.s32 5, %v219
    %v221 = vrot.slane %v30, %v220
    %v222 = vlaneseq
    %v223 = vshrl.u32 %v222, 7
    %v224 = vsub.s32 5, %v223
    %v225 = vrot.slane %v31, %v224
    %v226 = vadd.f32 %v208, %v217
    %v227 = vadd.f32 %v209, %v221
    %v228 = vadd.f32 %v210, %v225
    %v229 = vadd.f32 %v211, %v217
    %v230 = vadd.f32 %v212, %v221
    %v231 = vadd.f32 %v213, %v225
    %238 = vrot.lane.b32.xlu0 %v148, 96
    %v239 = vpop.permute.xlu0 %238
    %240 = vrot.lane.b32.xlu0 %v149, 96
    %v241 = vpop.permute.xlu0 %240
    %242 = vrot.lane.b32.xlu0 %v150, 96
    %v243 = vpop.permute.xlu0 %242
    %244 = vrot.lane.b32.xlu0 %v151, 96
    %v245 = vpop.permute.xlu0 %244
    %246 = vrot.lane.b32.xlu0 %v152, 96
    %v247 = vpop.permute.xlu0 %246
    %248 = vrot.lane.b32.xlu0 %v153, 96
    %v249 = vpop.permute.xlu0 %248
    %v250 = vsel %vm97, %v239, %v241
    %v251 = vsel %vm97, %v241, %v243
    %v252 = vsel %vm97, %v245, %v247
    %v253 = vsel %vm97, %v247, %v249
    %v260 = vmul.f32 %v226, %v250
    %v261 = vmul.f32 %v227, %v251
    %v262 = vmul.f32 %v228, %v243
    %v263 = vmul.f32 %v229, %v252
    %v264 = vmul.f32 %v230, %v253
    %v265 = vmul.f32 %v231, %v249
    %v266 = vadd.f32 %v190, %v260
    %v267 = vadd.f32 %v191, %v261
    %v268 = vadd.f32 %v192, %v262
    %v269 = vadd.f32 %v193, %v263
    %v270 = vadd.f32 %v194, %v264
    %v271 = vadd.f32 %v195, %v265
    %v272 = vlaneseq
    %v273 = vshrl.u32 %v272, 7
    %v274 = vsub.s32 6, %v273
    %v275 = vrot.slane %v29, %v274
    %v276 = vlaneseq
    %v277 = vshrl.u32 %v276, 7
    %v278 = vsub.s32 6, %v277
    %v279 = vrot.slane %v30, %v278
    %v280 = vlaneseq
    %v281 = vshrl.u32 %v280, 7
    %v282 = vsub.s32 6, %v281
    %v283 = vrot.slane %v31, %v282
    %v284 = vmul.f32 %v98, %v275
    %v285 = vmul.f32 %v98, %v279
    %v286 = vmul.f32 %v95, %v283
    %v287 = vmul.f32 %v99, %v275
    %v288 = vmul.f32 %v99, %v279
    %v289 = vmul.f32 %v96, %v283
    %v290 = vlaneseq
    %v291 = vshrl.u32 %v290, 7
    %v292 = vsub.s32 7, %v291
    %v293 = vrot.slane %v29, %v292
    %v294 = vlaneseq
    %v295 = vshrl.u32 %v294, 7
    %v296 = vsub.s32 7, %v295
    %v297 = vrot.slane %v30, %v296
    %v298 = vlaneseq
    %v299 = vshrl.u32 %v298, 7
    %v300 = vsub.s32 7, %v299
    %v301 = vrot.slane %v31, %v300
    %v302 = vadd.f32 %v284, %v293
    %v303 = vadd.f32 %v285, %v297
    %v304 = vadd.f32 %v286, %v301
    %v305 = vadd.f32 %v287, %v293
    %v306 = vadd.f32 %v288, %v297
    %v307 = vadd.f32 %v289, %v301
    %v308 = vmul.f32 %v302, %v266
    %v309 = vmul.f32 %v303, %v267
    %v310 = vmul.f32 %v304, %v268
    %v311 = vmul.f32 %v305, %v269
    %v312 = vmul.f32 %v306, %v270
    %v313 = vmul.f32 %v307, %v271
    %v314 = vlaneseq
    %v315 = vshrl.u32 %v314, 7
    %v316 = vsub.s32 0, %v315
    %v317 = vrot.slane %v32, %v316
    %v318 = vlaneseq
    %v319 = vshrl.u32 %v318, 7
    %v320 = vsub.s32 0, %v319
    %v321 = vrot.slane %v33, %v320
    %v322 = vlaneseq
    %v323 = vshrl.u32 %v322, 7
    %v324 = vsub.s32 0, %v323
    %v325 = vrot.slane %v34, %v324
    %v326 = vmul.f32 %v98, %v317
    %v327 = vmul.f32 %v98, %v321
    %v328 = vmul.f32 %v95, %v325
    %v329 = vmul.f32 %v99, %v317
    %v330 = vmul.f32 %v99, %v321
    %v331 = vmul.f32 %v96, %v325
    %v332 = vlaneseq
    %v333 = vshrl.u32 %v332, 7
    %v334 = vsub.s32 1, %v333
    %v335 = vrot.slane %v32, %v334
    %v336 = vlaneseq
    %v337 = vshrl.u32 %v336, 7
    %v338 = vsub.s32 1, %v337
    %v339 = vrot.slane %v33, %v338
    %v340 = vlaneseq
    %v341 = vshrl.u32 %v340, 7
    %v342 = vsub.s32 1, %v341
    %v343 = vrot.slane %v34, %v342
    %v344 = vadd.f32 %v326, %v335
    %v345 = vadd.f32 %v327, %v339
    %v346 = vadd.f32 %v328, %v343
    %v347 = vadd.f32 %v329, %v335
    %v348 = vadd.f32 %v330, %v339
    %v349 = vadd.f32 %v331, %v343
    %356 = vrot.lane.b32.xlu0 %v266, 96
    %v357 = vpop.permute.xlu0 %356
    %358 = vrot.lane.b32.xlu0 %v267, 96
    %v359 = vpop.permute.xlu0 %358
    %360 = vrot.lane.b32.xlu0 %v268, 96
    %v361 = vpop.permute.xlu0 %360
    %362 = vrot.lane.b32.xlu0 %v269, 96
    %v363 = vpop.permute.xlu0 %362
    %364 = vrot.lane.b32.xlu0 %v270, 96
    %v365 = vpop.permute.xlu0 %364
    %366 = vrot.lane.b32.xlu0 %v271, 96
    %v367 = vpop.permute.xlu0 %366
    %v368 = vsel %vm97, %v357, %v359
    %v369 = vsel %vm97, %v359, %v361
    %v370 = vsel %vm97, %v363, %v365
    %v371 = vsel %vm97, %v365, %v367
    %v378 = vmul.f32 %v344, %v368
    %v379 = vmul.f32 %v345, %v369
    %v380 = vmul.f32 %v346, %v361
    %v381 = vmul.f32 %v347, %v370
    %v382 = vmul.f32 %v348, %v371
    %v383 = vmul.f32 %v349, %v367
    %v384 = vadd.f32 %v308, %v378
    %v385 = vadd.f32 %v309, %v379
    %v386 = vadd.f32 %v310, %v380
    %v387 = vadd.f32 %v311, %v381
    %v388 = vadd.f32 %v312, %v382
    %v389 = vadd.f32 %v313, %v383
    %v390 = vlaneseq
    %v391 = vshrl.u32 %v390, 7
    %v392 = vsub.s32 2, %v391
    %v393 = vrot.slane %v32, %v392
    %v394 = vlaneseq
    %v395 = vshrl.u32 %v394, 7
    %v396 = vsub.s32 2, %v395
    %v397 = vrot.slane %v33, %v396
    %v398 = vmul.f32 %v98, %v393
    %v399 = vmul.f32 %v98, %v397
    %v400 = vmul.f32 %v99, %v393
    %v401 = vmul.f32 %v99, %v397
    %v402 = vlaneseq
    %v403 = vshrl.u32 %v402, 7
    %v404 = vsub.s32 3, %v403
    %v405 = vrot.slane %v32, %v404
    %v406 = vlaneseq
    %v407 = vshrl.u32 %v406, 7
    %v408 = vsub.s32 3, %v407
    %v409 = vrot.slane %v33, %v408
    %v410 = vadd.f32 %v398, %v405
    %v411 = vadd.f32 %v399, %v409
    %v412 = vadd.f32 %v400, %v405
    %v413 = vadd.f32 %v401, %v409
    %v414 = vmul.f32 %v410, %v384
    %v415 = vmul.f32 %v411, %v385
    %v416 = vmul.f32 %v412, %v387
    %v417 = vmul.f32 %v413, %v388
    %v418 = vlaneseq
    %v419 = vshrl.u32 %v418, 7
    %v420 = vsub.s32 4, %v419
    %v421 = vrot.slane %v32, %v420
    %v422 = vlaneseq
    %v423 = vshrl.u32 %v422, 7
    %v424 = vsub.s32 4, %v423
    %v425 = vrot.slane %v33, %v424
    %v426 = vmul.f32 %v98, %v421
    %v427 = vmul.f32 %v98, %v425
    %v428 = vmul.f32 %v99, %v421
    %v429 = vmul.f32 %v99, %v425
    %v430 = vlaneseq
    %v431 = vshrl.u32 %v430, 7
    %v432 = vsub.s32 5, %v431
    %v433 = vrot.slane %v32, %v432
    %v434 = vlaneseq
    %v435 = vshrl.u32 %v434, 7
    %v436 = vsub.s32 5, %v435
    %v437 = vrot.slane %v33, %v436
    %v438 = vadd.f32 %v426, %v433
    %v439 = vadd.f32 %v427, %v437
    %v440 = vadd.f32 %v428, %v433
    %v441 = vadd.f32 %v429, %v437
    %448 = vrot.lane.b32.xlu0 %v384, 96
    %v449 = vpop.permute.xlu0 %448
    %450 = vrot.lane.b32.xlu0 %v385, 96
    %v451 = vpop.permute.xlu0 %450
    %452 = vrot.lane.b32.xlu0 %v386, 96
    %v453 = vpop.permute.xlu0 %452
    %454 = vrot.lane.b32.xlu0 %v387, 96
    %v455 = vpop.permute.xlu0 %454
    %456 = vrot.lane.b32.xlu0 %v388, 96
    %v457 = vpop.permute.xlu0 %456
    %458 = vrot.lane.b32.xlu0 %v389, 96
    %v459 = vpop.permute.xlu0 %458
    %v460 = vsel %vm97, %v449, %v451
    %v461 = vsel %vm97, %v451, %v453
    %v462 = vsel %vm97, %v455, %v457
    %v463 = vsel %vm97, %v457, %v459
    %v468 = vmul.f32 %v438, %v460
    %v469 = vmul.f32 %v439, %v461
    %v470 = vmul.f32 %v440, %v462
    %v471 = vmul.f32 %v441, %v463
    %v472 = vadd.f32 %v414, %v468
    %v473 = vadd.f32 %v415, %v469
    %v474 = vadd.f32 %v416, %v470
    %v475 = vadd.f32 %v417, %v471
    %v476 = vxor.u32 %v27, 2147483648
    %v477 = vxor.u32 %v28, 2147483648
    %v478 = vmul.f32 %v476, 1.442695
    %v479 = vpow.pop %v478
    %v480 = vmul.f32 %v477, 1.442695
    %v481 = vpow.pop %v480
    %v482 = vadd.f32 %v479, 1.0
    %v483 = vadd.f32 %v481, 1.0
    %v484 = vrcp.pop %v482
    %v485 = vmul.f32 1.0, %v484
    %v486 = vrcp.pop %v483
    %v487 = vmul.f32 1.0, %v486
    %v488 = vmul.f32 %v27, %v485
    %v489 = vmul.f32 %v28, %v487
    %490 = vmatprep.subr.mxu0 0.0
    %491 = vmatpush1.msra.mxu0 %v39
    %492 = vmatprep.subr.mxu0 0.0
    %493 = vmatpush1.msra.mxu0 %v40
    %494 = vmatprep.subr.mxu0 0.0
    %495 = vmatpush1.msra.mxu0 %v41
    %496 = vmatprep.subr.mxu0 0.0
    %497 = vmatpush1.msra.mxu0 %v42
    %498 = vmatprep.subr.mxu0 0.0
    %499 = vmatpush1.msra.mxu0 %v43
    %500 = vmatprep.subr.mxu0 0.0
    %501 = vmatpush1.msra.mxu0 %v44
    %502 = vmatprep.subr.mxu0 0.0
    %503 = vmatpush1.msra.mxu0 %v45
    %504 = vmatprep.subr.mxu0 0.0
    %505 = vmatpush1.msra.mxu0 %v46
    %506 = vmatprep.subr.mxu0 0.0
    %507 = vmatpush1.msra.mxu0 %v47
    %508 = vmatprep.subr.mxu0 0.0
    %509 = vmatpush1.msra.mxu0 %v48
    %510 = vmatprep.subr.mxu0 0.0
    %511 = vmatpush1.msra.mxu0 %v49
    %512 = vmatprep.subr.mxu0 0.0
    %513 = vmatpush1.msra.mxu0 %v50
    %514 = vmatprep.subr.mxu0 0.0
    %515 = vmatpush1.msra.mxu0 %v51
    %516 = vmatprep.subr.mxu0 0.0
    %517 = vmatpush1.msra.mxu0 %v52
    %518 = vmatprep.subr.mxu0 0.0
    %519 = vmatpush1.msra.mxu0 %v53
    %520 = vmatprep.subr.mxu0 0.0
    %521 = vmatpush1.msra.mxu0 %v54
    %522 = vmatprep.subr.mxu0 0.0
    %523 = vmatpush1.msra.mxu0 %v55
    %524 = vmatprep.subr.mxu0 0.0
    %525 = vmatpush1.msra.mxu0 %v56
    %526 = vmatprep.subr.mxu0 0.0
    %527 = vmatpush1.msra.mxu0 %v57
    %528 = vmatprep.subr.mxu0 0.0
    %529 = vmatpush1.msra.mxu0 %v58
    %530 = vmatprep.subr.mxu0 0.0
    %531 = vmatpush1.msra.mxu0 %v59
    %532 = vmatprep.subr.mxu0 0.0
    %533 = vmatpush1.msra.mxu0 %v60
    %534 = vmatprep.subr.mxu0 0.0
    %535 = vmatpush1.msra.mxu0 %v61
    %536 = vmatprep.subr.mxu0 0.0
    %537 = vmatpush1.msra.mxu0 %v62
    %538 = vmatprep.subr.mxu0 0.0
    %539 = vmatpush1.msra.mxu0 %v63
    %540 = vmatprep.subr.mxu0 0.0
    %541 = vmatpush1.msra.mxu0 %v64
    %542 = vmatprep.subr.mxu0 0.0
    %543 = vmatpush1.msra.mxu0 %v65
    %544 = vmatprep.subr.mxu0 0.0
    %545 = vmatpush1.msra.mxu0 %v66
    %546 = vmatprep.subr.mxu0 0.0
    %547 = vmatpush1.msra.mxu0 %v67
    %548 = vmatprep.subr.mxu0 0.0
    %549 = vmatpush1.msra.mxu0 %v68
    %550 = vmatprep.subr.mxu0 0.0
    %551 = vmatpush1.msra.mxu0 %v69
    %552 = vmatprep.subr.mxu0 0.0
    %553 = vmatpush1.msra.mxu0 %v70
    %554 = vmatprep.mubr.f32.mxu0 %v473
    %555 = vmatmul.mubr.f32.gmra.mrb[0].mxu0 %v472
    %v556 = vpop.f32.mrb[0].mxu0
    %v557 = vadd.f32 0.0, %v556
    %v558 = vpop.f32.mrb[0].mxu0
    %559 = vmatprep.mubr.f32.mxu0 %v475
    %560 = vmatmul.mubr.f32.gmra.mrb[0].mxu0 %v474
    %v561 = vpop.f32.mrb[0].mxu0
    %v562 = vadd.f32 0.0, %v561
    %v563 = vpop.f32.mrb[0].mxu0
    %564 = vdwg.mxu0
    %v566 = vsel %vm91, %v488, 0
    %v569 = vsel %vm91, %v489, 0
    %571 = vmatprep.subr.mxu0 0.0
    %572 = vmatpush1.msra.mxu0 %v35
    %573 = vmatprep.subr.mxu0 0.0
    %574 = vmatpush1.msra.mxu0 %v36
    %575 = vmatprep.subr.mxu0 0.0
    %576 = vmatpush1.msra.mxu0 %v37
    %577 = vmatprep.subr.mxu0 0.0
    %578 = vmatpush1.msra.mxu0 %v38
    %579 = vmatprep.subr.mxu0 0.0
    %580 = vmatpush1.msra.mxu0 0.0
    %581 = vmatprep.subr.mxu0 0.0
    %582 = vmatpush1.msra.mxu0 0.0
    %583 = vmatprep.subr.mxu0 0.0
    %584 = vmatpush1.msra.mxu0 0.0
    %585 = vmatprep.subr.mxu0 0.0
    %586 = vmatpush1.msra.mxu0 0.0
    %587 = vmatprep.subr.mxu0 0.0
    %588 = vmatpush1.msra.mxu0 0.0
    %589 = vmatprep.subr.mxu0 0.0
    %590 = vmatpush1.msra.mxu0 0.0
    %591 = vmatprep.subr.mxu0 0.0
    %592 = vmatpush1.msra.mxu0 0.0
    %593 = vmatprep.subr.mxu0 0.0
    %594 = vmatpush1.msra.mxu0 0.0
    %595 = vmatprep.subr.mxu0 0.0
    %596 = vmatpush1.msra.mxu0 0.0
    %597 = vmatprep.subr.mxu0 0.0
    %598 = vmatpush1.msra.mxu0 0.0
    %599 = vmatprep.subr.mxu0 0.0
    %600 = vmatpush1.msra.mxu0 0.0
    %601 = vmatprep.subr.mxu0 0.0
    %602 = vmatpush1.msra.mxu0 0.0
    %603 = vmatprep.subr.mxu0 0.0
    %604 = vmatpush1.msra.mxu0 0.0
    %605 = vmatprep.subr.mxu0 0.0
    %606 = vmatpush1.msra.mxu0 0.0
    %607 = vmatprep.subr.mxu0 0.0
    %608 = vmatpush1.msra.mxu0 0.0
    %609 = vmatprep.subr.mxu0 0.0
    %610 = vmatpush1.msra.mxu0 0.0
    %611 = vmatprep.subr.mxu0 0.0
    %612 = vmatpush1.msra.mxu0 0.0
    %613 = vmatprep.subr.mxu0 0.0
    %614 = vmatpush1.msra.mxu0 0.0
    %615 = vmatprep.subr.mxu0 0.0
    %616 = vmatpush1.msra.mxu0 0.0
    %617 = vmatprep.subr.mxu0 0.0
    %618 = vmatpush1.msra.mxu0 0.0
    %619 = vmatprep.subr.mxu0 0.0
    %620 = vmatpush1.msra.mxu0 0.0
    %621 = vmatprep.subr.mxu0 0.0
    %622 = vmatpush1.msra.mxu0 0.0
    %623 = vmatprep.subr.mxu0 0.0
    %624 = vmatpush1.msra.mxu0 0.0
    %625 = vmatprep.subr.mxu0 0.0
    %626 = vmatpush1.msra.mxu0 0.0
    %627 = vmatprep.subr.mxu0 0.0
    %628 = vmatpush1.msra.mxu0 0.0
    %629 = vmatprep.subr.mxu0 0.0
    %630 = vmatpush1.msra.mxu0 0.0
    %631 = vmatprep.subr.mxu0 0.0
    %632 = vmatpush1.msra.mxu0 0.0
    %633 = vmatprep.subr.mxu0 0.0
    %634 = vmatpush1.msra.mxu0 0.0
    %635 = vmatprep.mubr.f32.mxu0 0.0
    %636 = vmatmul.mubr.f32.gmra.mrb[0].mxu0 %v566
    %v637 = vpop.f32.mrb[0].mxu0
    %v638 = vadd.f32 %v557, %v637
    %v639 = vpop.f32.mrb[0].mxu0
    %640 = vmatprep.mubr.f32.mxu0 0.0
    %641 = vmatmul.mubr.f32.gmra.mrb[0].mxu0 %v569
    %v642 = vpop.f32.mrb[0].mxu0
    %v643 = vadd.f32 %v562, %v642
    %v644 = vpop.f32.mrb[0].mxu0
    %645 = vdwg.mxu0
    %v646 = vld [vmem:[%s4] sm:$0xff]
    %v647 = vld [vmem:[%s4 + $0x8] sm:$0xff]
    %v648 = vld [vmem:[%s4 + $0x10] sm:$0x3f]
    %v649 = vld [vmem:[%s4 + $0x18] sm:$0x3f]
    %v650 = vld [vmem:[%s5] sm:$0xff]
    %v651 = vld [vmem:[%s5 + $0x8] sm:$0xff]
    %v652 = vld [vmem:[%s6] sm:$0xff]
    %v653 = vld [vmem:[%s6 + $0x8] sm:$0xff]
    %v654 = vld [vmem:[%s6 + $0x10] sm:$0xff]
    %v655 = vld [vmem:[%s6 + $0x18] sm:$0xff]
    %v656 = vld [vmem:[%s6 + $0x20] sm:$0xff]
    %v657 = vld [vmem:[%s6 + $0x28] sm:$0xff]
    %v658 = vld [vmem:[%s6 + $0x30] sm:$0xff]
    %v659 = vld [vmem:[%s6 + $0x38] sm:$0xff]
    %v660 = vld [vmem:[%s6 + $0x40] sm:$0xff]
    %v661 = vld [vmem:[%s6 + $0x48] sm:$0xff]
    %v662 = vld [vmem:[%s6 + $0x50] sm:$0xff]
    %v663 = vld [vmem:[%s6 + $0x58] sm:$0xff]
    %v664 = vld [vmem:[%s6 + $0x60] sm:$0xff]
    %v665 = vld [vmem:[%s6 + $0x68] sm:$0xff]
    %v666 = vld [vmem:[%s6 + $0x70] sm:$0xff]
    %v667 = vld [vmem:[%s6 + $0x78] sm:$0xff]
    %670 = vrot.lane.b32.xlu0 %v638, 16
    %v671 = vpop.permute.xlu0 %670
    %672 = vrot.lane.b32.xlu0 %v643, 16
    %v673 = vpop.permute.xlu0 %672
    %676 = vrot.lane.b32.xlu0 %v638, 32
    %v677 = vpop.permute.xlu0 %676
    %678 = vrot.lane.b32.xlu0 %v643, 32
    %v679 = vpop.permute.xlu0 %678
    %682 = vrot.lane.b32.xlu0 %v638, 48
    %v683 = vpop.permute.xlu0 %682
    %684 = vrot.lane.b32.xlu0 %v643, 48
    %v685 = vpop.permute.xlu0 %684
    %688 = vrot.lane.b32.xlu0 %v638, 64
    %v689 = vpop.permute.xlu0 %688
    %690 = vrot.lane.b32.xlu0 %v643, 64
    %v691 = vpop.permute.xlu0 %690
    %694 = vrot.lane.b32.xlu0 %v638, 80
    %v695 = vpop.permute.xlu0 %694
    %696 = vrot.lane.b32.xlu0 %v643, 80
    %v697 = vpop.permute.xlu0 %696
    %700 = vrot.lane.b32.xlu0 %v638, 96
    %v701 = vpop.permute.xlu0 %700
    %702 = vrot.lane.b32.xlu0 %v643, 96
    %v703 = vpop.permute.xlu0 %702
    %706 = vrot.lane.b32.xlu0 %v638, 112
    %v707 = vpop.permute.xlu0 %706
    %708 = vrot.lane.b32.xlu0 %v643, 112
    %v709 = vpop.permute.xlu0 %708
    %vm712 = vcmask 130048
    %v713 = vsel %vm712, %v638, %v671
    %v714 = vsel %vm712, %v643, %v673
    %v715 = vsel %vm91, %v713, %v677
    %v716 = vsel %vm91, %v714, %v679
    %vm717 = vcmask 392192
    %v718 = vsel %vm717, %v715, %v683
    %v719 = vsel %vm717, %v716, %v685
    %v720 = vsel %vm94, %v718, %v689
    %v721 = vsel %vm94, %v719, %v691
    %vm722 = vcmask 654336
    %v723 = vsel %vm722, %v720, %v695
    %v724 = vsel %vm722, %v721, %v697
    %v725 = vsel %vm97, %v723, %v701
    %v726 = vsel %vm97, %v724, %v703
    %vm727 = vcmask 916480
    %v728 = vsel %vm727, %v725, %v707
    %v729 = vsel %vm727, %v726, %v709
    %v730 = vlaneseq
    %v731 = vshrl.u32 %v730, 7
    %v732 = vsub.s32 0, %v731
    %v733 = vrot.slane %v646, %v732
    %v734 = vlaneseq
    %v735 = vshrl.u32 %v734, 7
    %v736 = vsub.s32 0, %v735
    %v737 = vrot.slane %v647, %v736
    %vm738 = vcmp.ge.f32.partialorder %v728, %v733
    %vm739 = vcmp.ge.f32.partialorder %v715, %v737
    %vm740 = vcmp.ge.f32.partialorder %v729, %v733
    %vm741 = vcmp.ge.f32.partialorder %v716, %v737
    %v742 = vlaneseq
    %v743 = vshrl.u32 %v742, 7
    %v744 = vsub.s32 1, %v743
    %v745 = vrot.slane %v646, %v744
    %v746 = vlaneseq
    %v747 = vshrl.u32 %v746, 7
    %v748 = vsub.s32 1, %v747
    %v749 = vrot.slane %v647, %v748
    %vm750 = vcmp.lt.f32.partialorder %v728, %v745
    %vm751 = vcmp.lt.f32.partialorder %v715, %v749
    %vm752 = vcmp.lt.f32.partialorder %v729, %v745
    %vm753 = vcmp.lt.f32.partialorder %v716, %v749
    %vm754 = vmand %vm738, %vm750
    %vm755 = vmand %vm739, %vm751
    %vm756 = vmand %vm740, %vm752
    %vm757 = vmand %vm741, %vm753
    %v758 = vsel %vm754, 1, 0
    %v759 = vsel %vm755, 1, 0
    %v760 = vsel %vm756, 1, 0
    %v761 = vsel %vm757, 1, 0
    %v762 = vcvt.s32.f32 %v758
    %v763 = vcvt.s32.f32 %v759
    %v764 = vcvt.s32.f32 %v760
    %v765 = vcvt.s32.f32 %v761
    %v766 = vlaneseq
    %v767 = vshrl.u32 %v766, 7
    %v768 = vsub.s32 2, %v767
    %v769 = vrot.slane %v646, %v768
    %v770 = vlaneseq
    %v771 = vshrl.u32 %v770, 7
    %v772 = vsub.s32 2, %v771
    %v773 = vrot.slane %v647, %v772
    %v774 = vmul.f32 %v728, %v769
    %v775 = vmul.f32 %v715, %v773
    %v776 = vmul.f32 %v729, %v769
    %v777 = vmul.f32 %v716, %v773
    %v778 = vlaneseq
    %v779 = vshrl.u32 %v778, 7
    %v780 = vsub.s32 3, %v779
    %v781 = vrot.slane %v646, %v780
    %v782 = vlaneseq
    %v783 = vshrl.u32 %v782, 7
    %v784 = vsub.s32 3, %v783
    %v785 = vrot.slane %v647, %v784
    %v786 = vadd.f32 %v774, %v781
    %v787 = vadd.f32 %v775, %v785
    %v788 = vadd.f32 %v776, %v781
    %v789 = vadd.f32 %v777, %v785
    %v790 = vmul.f32 %v786, %v762
    %v791 = vmul.f32 %v787, %v763
    %v792 = vmul.f32 %v788, %v764
    %v793 = vmul.f32 %v789, %v765
    %v794 = vlaneseq
    %v795 = vshrl.u32 %v794, 7
    %v796 = vsub.s32 4, %v795
    %v797 = vrot.slane %v646, %v796
    %v798 = vlaneseq
    %v799 = vshrl.u32 %v798, 7
    %v800 = vsub.s32 4, %v799
    %v801 = vrot.slane %v647, %v800
    %v802 = vmul.f32 %v728, %v797
    %v803 = vmul.f32 %v715, %v801
    %v804 = vmul.f32 %v729, %v797
    %v805 = vmul.f32 %v716, %v801
    %v806 = vlaneseq
    %v807 = vshrl.u32 %v806, 7
    %v808 = vsub.s32 5, %v807
    %v809 = vrot.slane %v646, %v808
    %v810 = vlaneseq
    %v811 = vshrl.u32 %v810, 7
    %v812 = vsub.s32 5, %v811
    %v813 = vrot.slane %v647, %v812
    %v814 = vadd.f32 %v802, %v809
    %v815 = vadd.f32 %v803, %v813
    %v816 = vadd.f32 %v804, %v809
    %v817 = vadd.f32 %v805, %v813
    %822 = vrot.lane.b32.xlu0 %v762, 112
    %v823 = vpop.permute.xlu0 %822
    %824 = vrot.lane.b32.xlu0 %v763, 112
    %v825 = vpop.permute.xlu0 %824
    %826 = vrot.lane.b32.xlu0 %v764, 112
    %v827 = vpop.permute.xlu0 %826
    %828 = vrot.lane.b32.xlu0 %v765, 112
    %v829 = vpop.permute.xlu0 %828
    %v830 = vsel %vm727, %v823, %v825
    %v831 = vsel %vm727, %v827, %v829
    %v836 = vmul.f32 %v814, %v830
    %v837 = vmul.f32 %v815, %v825
    %v838 = vmul.f32 %v816, %v831
    %v839 = vmul.f32 %v817, %v829
    %v840 = vadd.f32 %v790, %v836
    %v841 = vadd.f32 %v791, %v837
    %v842 = vadd.f32 %v792, %v838
    %v843 = vadd.f32 %v793, %v839
    %v844 = vlaneseq
    %v845 = vshrl.u32 %v844, 7
    %v846 = vsub.s32 6, %v845
    %v847 = vrot.slane %v646, %v846
    %v848 = vlaneseq
    %v849 = vshrl.u32 %v848, 7
    %v850 = vsub.s32 6, %v849
    %v851 = vrot.slane %v647, %v850
    %v852 = vmul.f32 %v728, %v847
    %v853 = vmul.f32 %v715, %v851
    %v854 = vmul.f32 %v729, %v847
    %v855 = vmul.f32 %v716, %v851
    %v856 = vlaneseq
    %v857 = vshrl.u32 %v856, 7
    %v858 = vsub.s32 7, %v857
    %v859 = vrot.slane %v646, %v858
    %v860 = vlaneseq
    %v861 = vshrl.u32 %v860, 7
    %v862 = vsub.s32 7, %v861
    %v863 = vrot.slane %v647, %v862
    %v864 = vadd.f32 %v852, %v859
    %v865 = vadd.f32 %v853, %v863
    %v866 = vadd.f32 %v854, %v859
    %v867 = vadd.f32 %v855, %v863
    %v868 = vmul.f32 %v864, %v840
    %v869 = vmul.f32 %v865, %v841
    %v870 = vmul.f32 %v866, %v842
    %v871 = vmul.f32 %v867, %v843
    %v872 = vlaneseq
    %v873 = vshrl.u32 %v872, 7
    %v874 = vsub.s32 0, %v873
    %v875 = vrot.slane %v648, %v874
    %v876 = vlaneseq
    %v877 = vshrl.u32 %v876, 7
    %v878 = vsub.s32 0, %v877
    %v879 = vrot.slane %v649, %v878
    %v880 = vmul.f32 %v728, %v875
    %v881 = vmul.f32 %v715, %v879
    %v882 = vmul.f32 %v729, %v875
    %v883 = vmul.f32 %v716, %v879
    %v884 = vlaneseq
    %v885 = vshrl.u32 %v884, 7
    %v886 = vsub.s32 1, %v885
    %v887 = vrot.slane %v648, %v886
    %v888 = vlaneseq
    %v889 = vshrl.u32 %v888, 7
    %v890 = vsub.s32 1, %v889
    %v891 = vrot.slane %v649, %v890
    %v892 = vadd.f32 %v880, %v887
    %v893 = vadd.f32 %v881, %v891
    %v894 = vadd.f32 %v882, %v887
    %v895 = vadd.f32 %v883, %v891
    %900 = vrot.lane.b32.xlu0 %v840, 112
    %v901 = vpop.permute.xlu0 %900
    %902 = vrot.lane.b32.xlu0 %v841, 112
    %v903 = vpop.permute.xlu0 %902
    %904 = vrot.lane.b32.xlu0 %v842, 112
    %v905 = vpop.permute.xlu0 %904
    %906 = vrot.lane.b32.xlu0 %v843, 112
    %v907 = vpop.permute.xlu0 %906
    %v908 = vsel %vm727, %v901, %v903
    %v909 = vsel %vm727, %v905, %v907
    %v914 = vmul.f32 %v892, %v908
    %v915 = vmul.f32 %v893, %v903
    %v916 = vmul.f32 %v894, %v909
    %v917 = vmul.f32 %v895, %v907
    %v918 = vadd.f32 %v868, %v914
    %v919 = vadd.f32 %v869, %v915
    %v920 = vadd.f32 %v870, %v916
    %v921 = vadd.f32 %v871, %v917
    %v922 = vlaneseq
    %v923 = vshrl.u32 %v922, 7
    %v924 = vsub.s32 2, %v923
    %v925 = vrot.slane %v648, %v924
    %v926 = vmul.f32 %v728, %v925
    %v927 = vmul.f32 %v729, %v925
    %v928 = vlaneseq
    %v929 = vshrl.u32 %v928, 7
    %v930 = vsub.s32 3, %v929
    %v931 = vrot.slane %v648, %v930
    %v932 = vadd.f32 %v926, %v931
    %v933 = vadd.f32 %v927, %v931
    %v934 = vmul.f32 %v932, %v918
    %v935 = vmul.f32 %v933, %v920
    %v936 = vlaneseq
    %v937 = vshrl.u32 %v936, 7
    %v938 = vsub.s32 4, %v937
    %v939 = vrot.slane %v648, %v938
    %v940 = vmul.f32 %v728, %v939
    %v941 = vmul.f32 %v729, %v939
    %v942 = vlaneseq
    %v943 = vshrl.u32 %v942, 7
    %v944 = vsub.s32 5, %v943
    %v945 = vrot.slane %v648, %v944
    %v946 = vadd.f32 %v940, %v945
    %v947 = vadd.f32 %v941, %v945
    %952 = vrot.lane.b32.xlu0 %v918, 112
    %v953 = vpop.permute.xlu0 %952
    %954 = vrot.lane.b32.xlu0 %v919, 112
    %v955 = vpop.permute.xlu0 %954
    %956 = vrot.lane.b32.xlu0 %v920, 112
    %v957 = vpop.permute.xlu0 %956
    %958 = vrot.lane.b32.xlu0 %v921, 112
    %v959 = vpop.permute.xlu0 %958
    %v960 = vsel %vm727, %v953, %v955
    %v961 = vsel %vm727, %v957, %v959
    %v964 = vmul.f32 %v946, %v960
    %v965 = vmul.f32 %v947, %v961
    %v966 = vadd.f32 %v934, %v964
    %v967 = vadd.f32 %v935, %v965
    %v968 = vxor.u32 %v638, 2147483648
    %v969 = vxor.u32 %v643, 2147483648
    %v970 = vmul.f32 %v968, 1.442695
    %v971 = vpow.pop %v970
    %v972 = vmul.f32 %v969, 1.442695
    %v973 = vpow.pop %v972
    %v974 = vadd.f32 %v971, 1.0
    %v975 = vadd.f32 %v973, 1.0
    %v976 = vrcp.pop %v974
    %v977 = vmul.f32 1.0, %v976
    %v978 = vrcp.pop %v975
    %v979 = vmul.f32 1.0, %v978
    %v980 = vmul.f32 %v638, %v977
    %v981 = vmul.f32 %v643, %v979
    %982 = vmatprep.subr.mxu0 0.0
    %983 = vmatpush1.msra.mxu0 %v652
    %984 = vmatprep.subr.mxu0 0.0
    %985 = vmatpush1.msra.mxu0 %v653
    %986 = vmatprep.subr.mxu0 0.0
    %987 = vmatpush1.msra.mxu0 %v654
    %988 = vmatprep.subr.mxu0 0.0
    %989 = vmatpush1.msra.mxu0 %v655
    %990 = vmatprep.subr.mxu0 0.0
    %991 = vmatpush1.msra.mxu0 %v656
    %992 = vmatprep.subr.mxu0 0.0
    %993 = vmatpush1.msra.mxu0 %v657
    %994 = vmatprep.subr.mxu0 0.0
    %995 = vmatpush1.msra.mxu0 %v658
    %996 = vmatprep.subr.mxu0 0.0
    %997 = vmatpush1.msra.mxu0 %v659
    %998 = vmatprep.subr.mxu0 0.0
    %999 = vmatpush1.msra.mxu0 %v660
    %1000 = vmatprep.subr.mxu0 0.0
    %1001 = vmatpush1.msra.mxu0 %v661
    %1002 = vmatprep.subr.mxu0 0.0
    %1003 = vmatpush1.msra.mxu0 %v662
    %1004 = vmatprep.subr.mxu0 0.0
    %1005 = vmatpush1.msra.mxu0 %v663
    %1006 = vmatprep.subr.mxu0 0.0
    %1007 = vmatpush1.msra.mxu0 %v664
    %1008 = vmatprep.subr.mxu0 0.0
    %1009 = vmatpush1.msra.mxu0 %v665
    %1010 = vmatprep.subr.mxu0 0.0
    %1011 = vmatpush1.msra.mxu0 %v666
    %1012 = vmatprep.subr.mxu0 0.0
    %1013 = vmatpush1.msra.mxu0 %v667
    %1014 = vmatprep.subr.mxu0 0.0
    %1015 = vmatpush1.msra.mxu0 0.0
    %1016 = vmatprep.subr.mxu0 0.0
    %1017 = vmatpush1.msra.mxu0 0.0
    %1018 = vmatprep.subr.mxu0 0.0
    %1019 = vmatpush1.msra.mxu0 0.0
    %1020 = vmatprep.subr.mxu0 0.0
    %1021 = vmatpush1.msra.mxu0 0.0
    %1022 = vmatprep.subr.mxu0 0.0
    %1023 = vmatpush1.msra.mxu0 0.0
    %1024 = vmatprep.subr.mxu0 0.0
    %1025 = vmatpush1.msra.mxu0 0.0
    %1026 = vmatprep.subr.mxu0 0.0
    %1027 = vmatpush1.msra.mxu0 0.0
    %1028 = vmatprep.subr.mxu0 0.0
    %1029 = vmatpush1.msra.mxu0 0.0
    %1030 = vmatprep.subr.mxu0 0.0
    %1031 = vmatpush1.msra.mxu0 0.0
    %1032 = vmatprep.subr.mxu0 0.0
    %1033 = vmatpush1.msra.mxu0 0.0
    %1034 = vmatprep.subr.mxu0 0.0
    %1035 = vmatpush1.msra.mxu0 0.0
    %1036 = vmatprep.subr.mxu0 0.0
    %1037 = vmatpush1.msra.mxu0 0.0
    %1038 = vmatprep.subr.mxu0 0.0
    %1039 = vmatpush1.msra.mxu0 0.0
    %1040 = vmatprep.subr.mxu0 0.0
    %1041 = vmatpush1.msra.mxu0 0.0
    %1042 = vmatprep.subr.mxu0 0.0
    %1043 = vmatpush1.msra.mxu0 0.0
    %1044 = vmatprep.subr.mxu0 0.0
    %1045 = vmatpush1.msra.mxu0 0.0
    %1046 = vmatprep.mubr.f32.mxu0 0.0
    %1047 = vmatmul.mubr.f32.gmra.mrb[0].mxu0 %v966
    %v1048 = vpop.f32.mrb[0].mxu0
    %v1049 = vadd.f32 0.0, %v1048
    %v1050 = vpop.f32.mrb[0].mxu0
    %1051 = vmatprep.mubr.f32.mxu0 0.0
    %1052 = vmatmul.mubr.f32.gmra.mrb[0].mxu0 %v967
    %v1053 = vpop.f32.mrb[0].mxu0
    %v1054 = vadd.f32 0.0, %v1053
    %v1055 = vpop.f32.mrb[0].mxu0
    %1056 = vdwg.mxu0
    %v1058 = vsel %vm712, %v980, 0
    %v1061 = vsel %vm712, %v981, 0
    %1063 = vmatprep.subr.mxu0 0.0
    %1064 = vmatpush1.msra.mxu0 %v650
    %1065 = vmatprep.subr.mxu0 0.0
    %1066 = vmatpush1.msra.mxu0 %v651
    %1067 = vmatprep.subr.mxu0 0.0
    %1068 = vmatpush1.msra.mxu0 0.0
    %1069 = vmatprep.subr.mxu0 0.0
    %1070 = vmatpush1.msra.mxu0 0.0
    %1071 = vmatprep.subr.mxu0 0.0
    %1072 = vmatpush1.msra.mxu0 0.0
    %1073 = vmatprep.subr.mxu0 0.0
    %1074 = vmatpush1.msra.mxu0 0.0
    %1075 = vmatprep.subr.mxu0 0.0
    %1076 = vmatpush1.msra.mxu0 0.0
    %1077 = vmatprep.subr.mxu0 0.0
    %1078 = vmatpush1.msra.mxu0 0.0
    %1079 = vmatprep.subr.mxu0 0.0
    %1080 = vmatpush1.msra.mxu0 0.0
    %1081 = vmatprep.subr.mxu0 0.0
    %1082 = vmatpush1.msra.mxu0 0.0
    %1083 = vmatprep.subr.mxu0 0.0
    %1084 = vmatpush1.msra.mxu0 0.0
    %1085 = vmatprep.subr.mxu0 0.0
    %1086 = vmatpush1.msra.mxu0 0.0
    %1087 = vmatprep.subr.mxu0 0.0
    %1088 = vmatpush1.msra.mxu0 0.0
    %1089 = vmatprep.subr.mxu0 0.0
    %1090 = vmatpush1.msra.mxu0 0.0
    %1091 = vmatprep.subr.mxu0 0.0
    %1092 = vmatpush1.msra.mxu0 0.0
    %1093 = vmatprep.subr.mxu0 0.0
    %1094 = vmatpush1.msra.mxu0 0.0
    %1095 = vmatprep.subr.mxu0 0.0
    %1096 = vmatpush1.msra.mxu0 0.0
    %1097 = vmatprep.subr.mxu0 0.0
    %1098 = vmatpush1.msra.mxu0 0.0
    %1099 = vmatprep.subr.mxu0 0.0
    %1100 = vmatpush1.msra.mxu0 0.0
    %1101 = vmatprep.subr.mxu0 0.0
    %1102 = vmatpush1.msra.mxu0 0.0
    %1103 = vmatprep.subr.mxu0 0.0
    %1104 = vmatpush1.msra.mxu0 0.0
    %1105 = vmatprep.subr.mxu0 0.0
    %1106 = vmatpush1.msra.mxu0 0.0
    %1107 = vmatprep.subr.mxu0 0.0
    %1108 = vmatpush1.msra.mxu0 0.0
    %1109 = vmatprep.subr.mxu0 0.0
    %1110 = vmatpush1.msra.mxu0 0.0
    %1111 = vmatprep.subr.mxu0 0.0
    %1112 = vmatpush1.msra.mxu0 0.0
    %1113 = vmatprep.subr.mxu0 0.0
    %1114 = vmatpush1.msra.mxu0 0.0
    %1115 = vmatprep.subr.mxu0 0.0
    %1116 = vmatpush1.msra.mxu0 0.0
    %1117 = vmatprep.subr.mxu0 0.0
    %1118 = vmatpush1.msra.mxu0 0.0
    %1119 = vmatprep.subr.mxu0 0.0
    %1120 = vmatpush1.msra.mxu0 0.0
    %1121 = vmatprep.subr.mxu0 0.0
    %1122 = vmatpush1.msra.mxu0 0.0
    %1123 = vmatprep.subr.mxu0 0.0
    %1124 = vmatpush1.msra.mxu0 0.0
    %1125 = vmatprep.subr.mxu0 0.0
    %1126 = vmatpush1.msra.mxu0 0.0
    %1127 = vmatprep.mubr.f32.mxu0 0.0
    %1128 = vmatmul.mubr.f32.gmra.mrb[0].mxu0 %v1058
    %v1129 = vpop.f32.mrb[0].mxu0
    %v1130 = vadd.f32 %v1049, %v1129
    %v1131 = vpop.f32.mrb[0].mxu0
    %1132 = vmatprep.mubr.f32.mxu0 0.0
    %1133 = vmatmul.mubr.f32.gmra.mrb[0].mxu0 %v1061
    %v1134 = vpop.f32.mrb[0].mxu0
    %v1135 = vadd.f32 %v1054, %v1134
    %v1136 = vpop.f32.mrb[0].mxu0
    %1137 = vdwg.mxu0
    %1138 = vst [vmem:[#allocation2] sm:$0xff] %v1130
    %1139 = vst [vmem:[#allocation2 + $0x8] sm:$0xff] %v1135
    // Predicated region
    $region30: #{tpu_custom_call.1} parent=1 // pred_check
      _
    $region31: #{tpu_custom_call.1} parent=1 // pred_check_branch
      %1141 = sbr.rel (0) target = $region33
    $region32: #{tpu_custom_call.1} parent=1 // pred_region
      %s1143 = ssub.s32 256, 256
      %1144 = vsyncadd [#allocation3], %s1143
      %s1145 = sshll.u32 [#allocation2], 4
      %s1146 = int_to_ptr.vmem [resolvable:$true] %s1145
      %1151 = dma.vmem_to_hbm [thread:$0]  %s1146, 256, %s7, [#allocation3], 128, 128, 8
    $region33: #{tpu_custom_call.1} parent=1 // pred_fallthru
      _
    // Predicated region
    $region34: #{tpu_custom_call.1} parent=1 // pred_check
      _
    $region35: #{tpu_custom_call.1} parent=1 // pred_check_branch
      %1153 = sbr.rel (0) target = $region37
    $region36: #{tpu_custom_call.1} parent=1 // pred_region
      %1154 = dma.done [#allocation3], 256
    $region37: #{tpu_custom_call.1} parent=1 // pred_fallthru
      _
    %1155 = vsyncpa [#allocation3], 1

</llo_original>
